<compile_context>
chip_gen: v7x
topology: tpu7x:2x2x1
jax: 0.10.0
libtpu: 0.0.40
codegen_flags: <defaults>
</compile_context>

<pallas_src>
import functools

import jax
import jax.numpy as jnp
from jax import lax
from jax.experimental import pallas as pl
from jax.experimental.pallas import tpu as pltpu


def mlp_kernel(x_ref, w1_ref, b1_ref, w2_ref, b2_ref, w3_ref, b3_ref,
               w4_ref, b4_ref, out_ref, *, operand_dtype, precision):
    """One (TB, 512) batch tile through the whole 512->256->128->64->8 MLP."""
    x = x_ref[...]                                                   # (TB, 512)

    h = jnp.dot(x, w1_ref[...], preferred_element_type=jnp.float32,
                precision=precision)
    h = jnp.maximum(h + b1_ref[...], 0.0)                            # (TB, 256) f32

    h = jnp.dot(h.astype(operand_dtype), w2_ref[...],
                preferred_element_type=jnp.float32, precision=precision)
    h = jnp.maximum(h + b2_ref[...], 0.0)                            # (TB, 128) f32

    h = jnp.dot(h.astype(operand_dtype), w3_ref[...],
                preferred_element_type=jnp.float32, precision=precision)
    h = jnp.maximum(h + b3_ref[...], 0.0)                            # (TB, 64) f32

    # Final layer already encodes the [p, 1-p] interleave via signed columns.
    logits = jnp.dot(h.astype(operand_dtype), w4_ref[...],
                     preferred_element_type=jnp.float32,
                     precision=precision) + b4_ref[...]
    out_ref[...] = jax.nn.sigmoid(logits)                            # (TB, 8) f32


def _round_up(n, m):
    return ((n + m - 1) // m) * m


def presddoia_mlp(x, params, *, tb=2048, operand_dtype=jnp.bfloat16):
    """x: (B, 512) float32 -> (B, 8) float32.

    params = (w1 (512,256), b1 (1,256), w2 (256,128), b2 (1,128),
              w3 (128,64),  b3 (1,64),  w4 (64,4),    b4 (1,4))
    Weights are stored transposed vs. PyTorch, i.e. y = x @ W + b.
    """
    B = x.shape[0]
    w1, b1, w2, b2, w3, b3, w4, b4 = params

    # Fold "stack((p0, 1-p0, p1, 1-p1, ...))" into the last layer:
    #   1 - sigmoid(z) = sigmoid(-z)
    # column 2j -> +W4[:, j], column 2j+1 -> -W4[:, j] (same for the bias).
    w4f = jnp.stack([w4, -w4], axis=2).reshape(w4.shape[0], 8)       # (64, 8)
    b4f = jnp.stack([b4, -b4], axis=2).reshape(1, 8)                 # (1, 8)

    # MXU operands: bf16 by default (single-pass MXU, half HBM traffic for x).
    # operand_dtype=jnp.float32 forces an f32-accurate (HIGHEST) matmul path.
    x_op = x.astype(operand_dtype)
    w1_op = w1.astype(operand_dtype)
    w2_op = w2.astype(operand_dtype)
    w3_op = w3.astype(operand_dtype)
    w4_op = w4f.astype(operand_dtype)
    precision = (lax.Precision.DEFAULT if operand_dtype == jnp.bfloat16
                 else lax.Precision.HIGHEST)

    # Batch tile: multiple of 8 (sublane), capped at `tb`.  No padding copy:
    # grid = cdiv(B, TB) and Pallas masks the ragged final block (tail rows
    # compute garbage that is never stored back).
    TB = min(tb, _round_up(max(B, 1), 8))
    grid = (pl.cdiv(B, TB),)

    # Weights / biases have a constant block index -> VMEM-resident, single
    # buffer (no point double-buffering constants).
    resident = dict(pipeline_mode=pl.Buffered(1))

    kernel = functools.partial(mlp_kernel, operand_dtype=operand_dtype,
                               precision=precision)

    out = pl.pallas_call(
        kernel,
        out_shape=jax.ShapeDtypeStruct((B, 8), jnp.float32),
        grid=grid,
        in_specs=[
            pl.BlockSpec((TB, 512), lambda i: (i, 0)),               # x: streamed
            pl.BlockSpec((512, 256), lambda i: (0, 0), **resident),
            pl.BlockSpec((1, 256), lambda i: (0, 0), **resident),
            pl.BlockSpec((256, 128), lambda i: (0, 0), **resident),
            pl.BlockSpec((1, 128), lambda i: (0, 0), **resident),
            pl.BlockSpec((128, 64), lambda i: (0, 0), **resident),
            pl.BlockSpec((1, 64), lambda i: (0, 0), **resident),
            pl.BlockSpec((64, 8), lambda i: (0, 0), **resident),
            pl.BlockSpec((1, 8), lambda i: (0, 0), **resident),
        ],
        out_specs=pl.BlockSpec((TB, 8), lambda i: (i, 0)),
        compiler_params=pltpu.CompilerParams(
            # Batch axis is embarrassingly parallel (sharded across TCs on
            # multi-TC parts).  On v7x, confirm both TCs are busy in a trace;
            # pltpu.CORE_PARALLEL is the explicit alternative.
            dimension_semantics=(pltpu.PARALLEL,),
            # TB=2048 footprint (double-buffered bf16 x tile + f32
            # intermediates + resident weights) is ~10 MiB; 48 MiB leaves
            # headroom for TB up to 4096 and stays under v7x's 64 MiB physical
            # VMEM while overriding v5e's 16 MiB scoped default.
            vmem_limit_bytes=48 * 1024 * 1024,
        ),
    )(x_op, w1_op, b1, w2_op, b2, w3_op, b3, w4_op, b4f)

    return out


def init_params(key):
    """Deterministic init mimicking nn.Linear's U(-1/sqrt(fan_in), 1/sqrt(fan_in))."""
    dims = [(512, 256), (256, 128), (128, 64), (64, 4)]
    params = []
    for i, (fan_in, fan_out) in enumerate(dims):
        kw, kb = jax.random.split(jax.random.fold_in(key, i))
        bound = 1.0 / jnp.sqrt(float(fan_in))
        w = jax.random.uniform(kw, (fan_in, fan_out), jnp.float32, -bound, bound)
        b = jax.random.uniform(kb, (1, fan_out), jnp.float32, -bound, bound)
        params += [w, b]
    return tuple(params)


def reference(x, params):
    """Pure-JAX f32 reference of the PyTorch forward (HIGHEST precision dots)."""
    w1, b1, w2, b2, w3, b3, w4, b4 = params
    dot = functools.partial(jnp.dot, precision=lax.Precision.HIGHEST,
                            preferred_element_type=jnp.float32)
    h = jax.nn.relu(dot(x, w1) + b1)
    h = jax.nn.relu(dot(h, w2) + b2)
    h = jax.nn.relu(dot(h, w3) + b3)
    y = jax.nn.sigmoid(dot(h, w4) + b4)
    c = 1.0 - y
    return jnp.stack(
        [y[:, 0], c[:, 0], y[:, 1], c[:, 1], y[:, 2], c[:, 2], y[:, 3], c[:, 3]],
        axis=1)


if __name__ == "__main__":
    key = jax.random.PRNGKey(0)
    k_x, k_p = jax.random.split(key)

    # B=20 (not a multiple of 8) exercises the ragged final block with no
    # padding copy; tb=8 additionally exercises a 3-step batch grid.
    B = 20
    x = jax.random.normal(k_x, (B, 512), dtype=jnp.float32)
    params = init_params(k_p)
    ref = reference(x, params)

    # Default fast path: bf16 MXU operands, f32 accumulation.
    out = jax.block_until_ready(presddoia_mlp(x, params))
    assert out.shape == (B, 8)
    assert jnp.allclose(out, ref, atol=2e-2, rtol=2e-2), "bf16 path mismatch"

    # Multi-tile + ragged-tail path.
    out_tiled = jax.block_until_ready(presddoia_mlp(x, params, tb=8))
    assert jnp.allclose(out_tiled, ref, atol=2e-2, rtol=2e-2), "tiled path mismatch"

    # Exact-f32 operand path matches the f32 reference tightly.
    out_f32 = jax.block_until_ready(
        presddoia_mlp(x, params, operand_dtype=jnp.float32))
    assert jnp.allclose(out_f32, ref, atol=1e-5, rtol=1e-5), "f32 path mismatch"

    print("KERNEL_OK")
</pallas_src>

<mosaic_0001>
module attributes {stable_mosaic.version = 11 : i64} {
  func.func @mlp_kernel(%arg0: i32, %arg1: memref<24x512xbf16, #tpu.memory_space<vmem>>, %arg2: memref<512x256xbf16, #tpu.memory_space<vmem>>, %arg3: memref<1x256xf32, #tpu.memory_space<vmem>>, %arg4: memref<256x128xbf16, #tpu.memory_space<vmem>>, %arg5: memref<1x128xf32, #tpu.memory_space<vmem>>, %arg6: memref<128x64xbf16, #tpu.memory_space<vmem>>, %arg7: memref<1x64xf32, #tpu.memory_space<vmem>>, %arg8: memref<64x8xbf16, #tpu.memory_space<vmem>>, %arg9: memref<1x8xf32, #tpu.memory_space<vmem>>, %arg10: memref<24x8xf32, #tpu.memory_space<vmem>>) attributes {dimension_semantics = [#tpu.dimension_semantics<parallel>], iteration_bounds = array<i64: 1>, scalar_prefetch = 0 : i64, scratch_operands = 0 : i64, tpu.core_type = #tpu.core_type<tc>, window_params = [{transform_indices = @transform_0, window_bounds = array<i64: 24, 512>}, {pipeline_mode = #tpu.pipeline_mode<synchronous>, transform_indices = @transform_1, window_bounds = array<i64: 512, 256>}, {pipeline_mode = #tpu.pipeline_mode<synchronous>, transform_indices = @transform_2, window_bounds = array<i64: 1, 256>}, {pipeline_mode = #tpu.pipeline_mode<synchronous>, transform_indices = @transform_3, window_bounds = array<i64: 256, 128>}, {pipeline_mode = #tpu.pipeline_mode<synchronous>, transform_indices = @transform_4, window_bounds = array<i64: 1, 128>}, {pipeline_mode = #tpu.pipeline_mode<synchronous>, transform_indices = @transform_5, window_bounds = array<i64: 128, 64>}, {pipeline_mode = #tpu.pipeline_mode<synchronous>, transform_indices = @transform_6, window_bounds = array<i64: 1, 64>}, {pipeline_mode = #tpu.pipeline_mode<synchronous>, transform_indices = @transform_7, window_bounds = array<i64: 64, 8>}, {pipeline_mode = #tpu.pipeline_mode<synchronous>, transform_indices = @transform_8, window_bounds = array<i64: 1, 8>}, {transform_indices = @transform_9, window_bounds = array<i64: 24, 8>}]} {
    %c0 = arith.constant 0 : index
    %c0_0 = arith.constant 0 : index
    %0 = vector.load %arg1[%c0, %c0_0] : memref<24x512xbf16, #tpu.memory_space<vmem>>, vector<24x512xbf16>
    %c0_1 = arith.constant 0 : index
    %c0_2 = arith.constant 0 : index
    %1 = vector.load %arg2[%c0_1, %c0_2] : memref<512x256xbf16, #tpu.memory_space<vmem>>, vector<512x256xbf16>
    %cst = arith.constant dense<0.000000e+00> : vector<24x256xf32>
    %2 = tpu.matmul %0, %1, %cst {dimension_numbers = #tpu.dot_dimension_numbers<[1], [0], [0], [1], [0, 0, 1, 1], [], []>} : vector<24x512xbf16>, vector<512x256xbf16>, vector<24x256xf32> -> vector<24x256xf32>
    %c0_3 = arith.constant 0 : index
    %c0_4 = arith.constant 0 : index
    %3 = vector.load %arg3[%c0_3, %c0_4] : memref<1x256xf32, #tpu.memory_space<vmem>>, vector<1x256xf32>
    %4 = vector.broadcast %3 : vector<1x256xf32> to vector<24x256xf32>
    %5 = arith.addf %2, %4 : vector<24x256xf32>
    %cst_5 = arith.constant 0.000000e+00 : f32
    %6 = vector.broadcast %cst_5 : f32 to vector<24x256xf32>
    %7 = arith.maximumf %5, %6 : vector<24x256xf32>
    %8 = arith.truncf %7 : vector<24x256xf32> to vector<24x256xbf16>
    %c0_6 = arith.constant 0 : index
    %c0_7 = arith.constant 0 : index
    %9 = vector.load %arg4[%c0_6, %c0_7] : memref<256x128xbf16, #tpu.memory_space<vmem>>, vector<256x128xbf16>
    %cst_8 = arith.constant dense<0.000000e+00> : vector<24x128xf32>
    %10 = tpu.matmul %8, %9, %cst_8 {dimension_numbers = #tpu.dot_dimension_numbers<[1], [0], [0], [1], [0, 0, 1, 1], [], []>} : vector<24x256xbf16>, vector<256x128xbf16>, vector<24x128xf32> -> vector<24x128xf32>
    %c0_9 = arith.constant 0 : index
    %c0_10 = arith.constant 0 : index
    %11 = vector.load %arg5[%c0_9, %c0_10] : memref<1x128xf32, #tpu.memory_space<vmem>>, vector<1x128xf32>
    %12 = vector.broadcast %11 : vector<1x128xf32> to vector<24x128xf32>
    %13 = arith.addf %10, %12 : vector<24x128xf32>
    %cst_11 = arith.constant 0.000000e+00 : f32
    %14 = vector.broadcast %cst_11 : f32 to vector<24x128xf32>
    %15 = arith.maximumf %13, %14 : vector<24x128xf32>
    %16 = arith.truncf %15 : vector<24x128xf32> to vector<24x128xbf16>
    %c0_12 = arith.constant 0 : index
    %c0_13 = arith.constant 0 : index
    %17 = vector.load %arg6[%c0_12, %c0_13] : memref<128x64xbf16, #tpu.memory_space<vmem>>, vector<128x64xbf16>
    %cst_14 = arith.constant dense<0.000000e+00> : vector<24x64xf32>
    %18 = tpu.matmul %16, %17, %cst_14 {dimension_numbers = #tpu.dot_dimension_numbers<[1], [0], [0], [1], [0, 0, 1, 1], [], []>} : vector<24x128xbf16>, vector<128x64xbf16>, vector<24x64xf32> -> vector<24x64xf32>
    %c0_15 = arith.constant 0 : index
    %c0_16 = arith.constant 0 : index
    %19 = vector.load %arg7[%c0_15, %c0_16] : memref<1x64xf32, #tpu.memory_space<vmem>>, vector<1x64xf32>
    %20 = vector.broadcast %19 : vector<1x64xf32> to vector<24x64xf32>
    %21 = arith.addf %18, %20 : vector<24x64xf32>
    %cst_17 = arith.constant 0.000000e+00 : f32
    %22 = vector.broadcast %cst_17 : f32 to vector<24x64xf32>
    %23 = arith.maximumf %21, %22 : vector<24x64xf32>
    %24 = arith.truncf %23 : vector<24x64xf32> to vector<24x64xbf16>
    %c0_18 = arith.constant 0 : index
    %c0_19 = arith.constant 0 : index
    %25 = vector.load %arg8[%c0_18, %c0_19] : memref<64x8xbf16, #tpu.memory_space<vmem>>, vector<64x8xbf16>
    %cst_20 = arith.constant dense<0.000000e+00> : vector<24x8xf32>
    %26 = tpu.matmul %24, %25, %cst_20 {dimension_numbers = #tpu.dot_dimension_numbers<[1], [0], [0], [1], [0, 0, 1, 1], [], []>} : vector<24x64xbf16>, vector<64x8xbf16>, vector<24x8xf32> -> vector<24x8xf32>
    %c0_21 = arith.constant 0 : index
    %c0_22 = arith.constant 0 : index
    %27 = vector.load %arg9[%c0_21, %c0_22] : memref<1x8xf32, #tpu.memory_space<vmem>>, vector<1x8xf32>
    %28 = vector.broadcast %27 : vector<1x8xf32> to vector<24x8xf32>
    %29 = arith.addf %26, %28 : vector<24x8xf32>
    %30 = arith.negf %29 : vector<24x8xf32>
    %31 = math.exp %30 : vector<24x8xf32>
    %cst_23 = arith.constant 1.000000e+00 : f32
    %32 = vector.broadcast %cst_23 : f32 to vector<24x8xf32>
    %33 = arith.addf %32, %31 : vector<24x8xf32>
    %34 = arith.divf %32, %33 : vector<24x8xf32>
    %c0_24 = arith.constant 0 : index
    %c0_25 = arith.constant 0 : index
    %35 = vector.load %arg10[%c0_24, %c0_25] : memref<24x8xf32, #tpu.memory_space<vmem>>, vector<24x8xf32>
    tpu.vector_store %arg10[%c0_24, %c0_25], %34 {strides = array<i32>} : memref<24x8xf32, #tpu.memory_space<vmem>>, vector<24x8xf32>,
    return
  }
  func.func @transform_0(%arg0: i32) -> (i32, i32) {
    %c0_i32 = arith.constant 0 : i32
    %c0_i32_0 = arith.constant 0 : i32
    return %arg0, %c0_i32 : i32, i32
  }
  func.func @transform_1(%arg0: i32) -> (i32, i32) {
    %c0_i32 = arith.constant 0 : i32
    %c0_i32_0 = arith.constant 0 : i32
    %c0_i32_1 = arith.constant 0 : i32
    return %c0_i32, %c0_i32_0 : i32, i32
  }
  func.func @transform_2(%arg0: i32) -> (i32, i32) {
    %c0_i32 = arith.constant 0 : i32
    %c0_i32_0 = arith.constant 0 : i32
    %c0_i32_1 = arith.constant 0 : i32
    return %c0_i32, %c0_i32_0 : i32, i32
  }
  func.func @transform_3(%arg0: i32) -> (i32, i32) {
    %c0_i32 = arith.constant 0 : i32
    %c0_i32_0 = arith.constant 0 : i32
    %c0_i32_1 = arith.constant 0 : i32
    return %c0_i32, %c0_i32_0 : i32, i32
  }
  func.func @transform_4(%arg0: i32) -> (i32, i32) {
    %c0_i32 = arith.constant 0 : i32
    %c0_i32_0 = arith.constant 0 : i32
    %c0_i32_1 = arith.constant 0 : i32
    return %c0_i32, %c0_i32_0 : i32, i32
  }
  func.func @transform_5(%arg0: i32) -> (i32, i32) {
    %c0_i32 = arith.constant 0 : i32
    %c0_i32_0 = arith.constant 0 : i32
    %c0_i32_1 = arith.constant 0 : i32
    return %c0_i32, %c0_i32_0 : i32, i32
  }
  func.func @transform_6(%arg0: i32) -> (i32, i32) {
    %c0_i32 = arith.constant 0 : i32
    %c0_i32_0 = arith.constant 0 : i32
    %c0_i32_1 = arith.constant 0 : i32
    return %c0_i32, %c0_i32_0 : i32, i32
  }
  func.func @transform_7(%arg0: i32) -> (i32, i32) {
    %c0_i32 = arith.constant 0 : i32
    %c0_i32_0 = arith.constant 0 : i32
    %c0_i32_1 = arith.constant 0 : i32
    return %c0_i32, %c0_i32_0 : i32, i32
  }
  func.func @transform_8(%arg0: i32) -> (i32, i32) {
    %c0_i32 = arith.constant 0 : i32
    %c0_i32_0 = arith.constant 0 : i32
    %c0_i32_1 = arith.constant 0 : i32
    return %c0_i32, %c0_i32_0 : i32, i32
  }
  func.func @transform_9(%arg0: i32) -> (i32, i32) {
    %c0_i32 = arith.constant 0 : i32
    %c0_i32_0 = arith.constant 0 : i32
    return %arg0, %c0_i32 : i32, i32
  }
}

</mosaic_0001>

<llo_original>
// kernel: tpu_custom_call.1
$region0: #{tpu_custom_call.1}
  #allocation0 [shape = 'u32[]', space=smem, size = 0x4, offset = 0x4, fixed_abs, tag = 'smem constant byte address 0x4 - core index']
  #allocation1 [shape = 'u32[144,128]{1,0:T(1,128)}', space=vmem, size = 0x12000, scoped, tag = 'internal scratch']
  %s0 = inlined_call_operand.hbm [shape: bf16[20,512], index: 0, kind: input, shape index: {}]
  %s1 = inlined_call_operand.hbm [shape: bf16[512,256], index: 1, kind: input, shape index: {}]
  %s2 = inlined_call_operand.vmem [shape: f32[1,256], index: 2, kind: input, shape index: {}]
  %s3 = inlined_call_operand.vmem [shape: bf16[256,128], index: 3, kind: input, shape index: {}]
  %s4 = inlined_call_operand.vmem [shape: f32[1,128], index: 4, kind: input, shape index: {}]
  %s5 = inlined_call_operand.vmem [shape: bf16[128,64], index: 5, kind: input, shape index: {}]
  %s6 = inlined_call_operand.vmem [shape: f32[1,64], index: 6, kind: input, shape index: {}]
  %s7 = inlined_call_operand.vmem [shape: bf16[64,8], index: 7, kind: input, shape index: {}]
  %s8 = inlined_call_operand.vmem [shape: f32[1,8], index: 8, kind: input, shape index: {}]
  %s9 = inlined_call_operand.vmem [shape: f32[20,8], index: 9, kind: output, shape index: {}]
  %s10 = sld [smem:[#allocation0]]
  $region54: #{tpu_custom_call.1} parent=0
    _
  %s12 = ssub.s32 1, %s10
  %s13 = scalar_select 0, %s12, %s10
  $region1: #{tpu_custom_call.1} parent=0
    #allocation2 [shape = 'u8[24576]{0}', space=vmem, size = 0x6000, scoped, tag = 'input window, operand 0, single buffered']
    #allocation3 [shape = 's32[1]{0}', space=sflag, size = 0x4, scoped, tag = 'scoped memory for tpu_custom_call.1']
    #allocation4 [shape = 'u8[262144]{0}', space=vmem, size = 0x40000, scoped, tag = 'input window, operand 1, single buffered']
    #allocation5 [shape = 's32[1]{0}', space=sflag, size = 0x4, scoped, tag = 'scoped memory for tpu_custom_call.1']
    %14 = vsyncpa [#allocation3], 0
    %15 = vsyncpa [#allocation5], 0
    // Predicated region
    $region2: #{tpu_custom_call.1} parent=1 // pred_check
      _
    $region3: #{tpu_custom_call.1} parent=1 // pred_check_branch
      %17 = sbr.rel (0) target = $region5
    $region4: #{tpu_custom_call.1} parent=1 // pred_region
      %s19 = ssub.s32 768, 768
      %20 = vsyncadd [#allocation3], %s19
      %s21 = sshll.u32 [#allocation2], 4
      %s22 = int_to_ptr.vmem [resolvable:$true] %s21
      %27 = dma.hbm_to_vmem [thread:$0]  %s0, 768, %s22, [#allocation3], 256, 256, 16
    $region5: #{tpu_custom_call.1} parent=1 // pred_fallthru
      _
    // Predicated region
    $region6: #{tpu_custom_call.1} parent=1 // pred_check
      _
    $region7: #{tpu_custom_call.1} parent=1 // pred_check_branch
      %29 = sbr.rel (0) target = $region9
    $region8: #{tpu_custom_call.1} parent=1 // pred_region
      %s31 = ssub.s32 8192, 8192
      %32 = vsyncadd [#allocation5], %s31
      %s33 = sshll.u32 [#allocation4], 4
      %s34 = int_to_ptr.vmem [resolvable:$true] %s33
      %39 = dma.hbm_to_vmem [thread:$0]  %s1, 8192, %s34, [#allocation5], 128, 128, 8
    $region9: #{tpu_custom_call.1} parent=1 // pred_fallthru
      _
    // Predicated region
    $region10: #{tpu_custom_call.1} parent=1 // pred_check
      _
    $region11: #{tpu_custom_call.1} parent=1 // pred_check_branch
      %41 = sbr.rel (0) target = $region13
    $region12: #{tpu_custom_call.1} parent=1 // pred_region
      _
    $region13: #{tpu_custom_call.1} parent=1 // pred_fallthru
      _
    // Predicated region
    $region14: #{tpu_custom_call.1} parent=1 // pred_check
      _
    $region15: #{tpu_custom_call.1} parent=1 // pred_check_branch
      %43 = sbr.rel (0) target = $region17
    $region16: #{tpu_custom_call.1} parent=1 // pred_region
      _
    $region17: #{tpu_custom_call.1} parent=1 // pred_fallthru
      _
    // Predicated region
    $region18: #{tpu_custom_call.1} parent=1 // pred_check
      _
    $region19: #{tpu_custom_call.1} parent=1 // pred_check_branch
      %45 = sbr.rel (0) target = $region21
    $region20: #{tpu_custom_call.1} parent=1 // pred_region
      _
    $region21: #{tpu_custom_call.1} parent=1 // pred_fallthru
      _
    // Predicated region
    $region22: #{tpu_custom_call.1} parent=1 // pred_check
      _
    $region23: #{tpu_custom_call.1} parent=1 // pred_check_branch
      %47 = sbr.rel (0) target = $region25
    $region24: #{tpu_custom_call.1} parent=1 // pred_region
      _
    $region25: #{tpu_custom_call.1} parent=1 // pred_fallthru
      _
    // Predicated region
    $region26: #{tpu_custom_call.1} parent=1 // pred_check
      _
    $region27: #{tpu_custom_call.1} parent=1 // pred_check_branch
      %49 = sbr.rel (0) target = $region29
    $region28: #{tpu_custom_call.1} parent=1 // pred_region
      _
    $region29: #{tpu_custom_call.1} parent=1 // pred_fallthru
      _
    // Predicated region
    $region30: #{tpu_custom_call.1} parent=1 // pred_check
      _
    $region31: #{tpu_custom_call.1} parent=1 // pred_check_branch
      %51 = sbr.rel (0) target = $region33
    $region32: #{tpu_custom_call.1} parent=1 // pred_region
      _
    $region33: #{tpu_custom_call.1} parent=1 // pred_fallthru
      _
    // Predicated region
    $region34: #{tpu_custom_call.1} parent=1 // pred_check
      _
    $region35: #{tpu_custom_call.1} parent=1 // pred_check_branch
      %53 = sbr.rel (0) target = $region37
    $region36: #{tpu_custom_call.1} parent=1 // pred_region
      _
    $region37: #{tpu_custom_call.1} parent=1 // pred_fallthru
      _
    // Predicated region
    $region38: #{tpu_custom_call.1} parent=1 // pred_check
      _
    $region39: #{tpu_custom_call.1} parent=1 // pred_check_branch
      %55 = sbr.rel (0) target = $region41
    $region40: #{tpu_custom_call.1} parent=1 // pred_region
      %56 = dma.done [#allocation3], 768
    $region41: #{tpu_custom_call.1} parent=1 // pred_fallthru
      _
    // Predicated region
    $region42: #{tpu_custom_call.1} parent=1 // pred_check
      _
    $region43: #{tpu_custom_call.1} parent=1 // pred_check_branch
      %58 = sbr.rel (0) target = $region45
    $region44: #{tpu_custom_call.1} parent=1 // pred_region
      %59 = dma.done [#allocation5], 8192
    $region45: #{tpu_custom_call.1} parent=1 // pred_fallthru
      _
    %v61 = vld [vmem:[#allocation2] sm:$0xff]
    %v62 = vld [vmem:[#allocation2 + $0x8] sm:$0xff]
    %v63 = vld [vmem:[#allocation2 + $0x10] sm:$0xff]
    %v64 = vld [vmem:[#allocation2 + $0x18] sm:$0xff]
    %v65 = vld [vmem:[#allocation2 + $0x20] sm:$0xff]
    %v66 = vld [vmem:[#allocation2 + $0x28] sm:$0xff]
    %v67 = vld [vmem:[#allocation4] sm:$0xff]
    %v68 = vld [vmem:[#allocation4 + $0x8] sm:$0xff]
    %v69 = vld [vmem:[#allocation4 + $0x10] sm:$0xff]
    %v70 = vld [vmem:[#allocation4 + $0x18] sm:$0xff]
    %v71 = vld [vmem:[#allocation4 + $0x20] sm:$0xff]
    %v72 = vld [vmem:[#allocation4 + $0x28] sm:$0xff]
    %v73 = vld [vmem:[#allocation4 + $0x30] sm:$0xff]
    %v74 = vld [vmem:[#allocation4 + $0x38] sm:$0xff]
    %v75 = vld [vmem:[#allocation4 + $0x40] sm:$0xff]
    %v76 = vld [vmem:[#allocation4 + $0x48] sm:$0xff]
    %v77 = vld [vmem:[#allocation4 + $0x50] sm:$0xff]
    %v78 = vld [vmem:[#allocation4 + $0x58] sm:$0xff]
    %v79 = vld [vmem:[#allocation4 + $0x60] sm:$0xff]
    %v80 = vld [vmem:[#allocation4 + $0x68] sm:$0xff]
    %v81 = vld [vmem:[#allocation4 + $0x70] sm:$0xff]
    %v82 = vld [vmem:[#allocation4 + $0x78] sm:$0xff]
    %v83 = vld [vmem:[#allocation4 + $0x80] sm:$0xff]
    %v84 = vld [vmem:[#allocation4 + $0x88] sm:$0xff]
    %v85 = vld [vmem:[#allocation4 + $0x90] sm:$0xff]
    %v86 = vld [vmem:[#allocation4 + $0x98] sm:$0xff]
    %v87 = vld [vmem:[#allocation4 + $0xa0] sm:$0xff]
    %v88 = vld [vmem:[#allocation4 + $0xa8] sm:$0xff]
    %v89 = vld [vmem:[#allocation4 + $0xb0] sm:$0xff]
    %v90 = vld [vmem:[#allocation4 + $0xb8] sm:$0xff]
    %v91 = vld [vmem:[#allocation4 + $0xc0] sm:$0xff]
    %v92 = vld [vmem:[#allocation4 + $0xc8] sm:$0xff]
    %v93 = vld [vmem:[#allocation4 + $0xd0] sm:$0xff]
    %v94 = vld [vmem:[#allocation4 + $0xd8] sm:$0xff]
    %v95 = vld [vmem:[#allocation4 + $0xe0] sm:$0xff]
    %v96 = vld [vmem:[#allocation4 + $0xe8] sm:$0xff]
    %v97 = vld [vmem:[#allocation4 + $0xf0] sm:$0xff]
    %v98 = vld [vmem:[#allocation4 + $0xf8] sm:$0xff]
    %v99 = vld [vmem:[#allocation4 + $0x100] sm:$0xff]
    %v100 = vld [vmem:[#allocation4 + $0x108] sm:$0xff]
    %v101 = vld [vmem:[#allocation4 + $0x110] sm:$0xff]
    %v102 = vld [vmem:[#allocation4 + $0x118] sm:$0xff]
    %v103 = vld [vmem:[#allocation4 + $0x120] sm:$0xff]
    %v104 = vld [vmem:[#allocation4 + $0x128] sm:$0xff]
    %v105 = vld [vmem:[#allocation4 + $0x130] sm:$0xff]
    %v106 = vld [vmem:[#allocation4 + $0x138] sm:$0xff]
    %v107 = vld [vmem:[#allocation4 + $0x140] sm:$0xff]
    %v108 = vld [vmem:[#allocation4 + $0x148] sm:$0xff]
    %v109 = vld [vmem:[#allocation4 + $0x150] sm:$0xff]
    %v110 = vld [vmem:[#allocation4 + $0x158] sm:$0xff]
    %v111 = vld [vmem:[#allocation4 + $0x160] sm:$0xff]
    %v112 = vld [vmem:[#allocation4 + $0x168] sm:$0xff]
    %v113 = vld [vmem:[#allocation4 + $0x170] sm:$0xff]
    %v114 = vld [vmem:[#allocation4 + $0x178] sm:$0xff]
    %v115 = vld [vmem:[#allocation4 + $0x180] sm:$0xff]
    %v116 = vld [vmem:[#allocation4 + $0x188] sm:$0xff]
    %v117 = vld [vmem:[#allocation4 + $0x190] sm:$0xff]
    %v118 = vld [vmem:[#allocation4 + $0x198] sm:$0xff]
    %v119 = vld [vmem:[#allocation4 + $0x1a0] sm:$0xff]
    %v120 = vld [vmem:[#allocation4 + $0x1a8] sm:$0xff]
    %v121 = vld [vmem:[#allocation4 + $0x1b0] sm:$0xff]
    %v122 = vld [vmem:[#allocation4 + $0x1b8] sm:$0xff]
    %v123 = vld [vmem:[#allocation4 + $0x1c0] sm:$0xff]
    %v124 = vld [vmem:[#allocation4 + $0x1c8] sm:$0xff]
    %v125 = vld [vmem:[#allocation4 + $0x1d0] sm:$0xff]
    %v126 = vld [vmem:[#allocation4 + $0x1d8] sm:$0xff]
    %v127 = vld [vmem:[#allocation4 + $0x1e0] sm:$0xff]
    %v128 = vld [vmem:[#allocation4 + $0x1e8] sm:$0xff]
    %v129 = vld [vmem:[#allocation4 + $0x1f0] sm:$0xff]
    %v130 = vld [vmem:[#allocation4 + $0x1f8] sm:$0xff]
    %v131 = vld [vmem:[%s2] sm:$0x3]
    %v133 = vlaneseq
    %v134 = vshrl.u32 %v133, 7
    %v135 = vsub.s32 0, %v134
    %v136 = vrot.slane %v131, %v135
    %v137 = vlaneseq
    %v138 = vshrl.u32 %v137, 7
    %v139 = vsub.s32 1, %v138
    %v140 = vrot.slane %v131, %v139
    %v149 = vunpack.c.l.b16 %v61
    %v150 = vunpack.c.h.b16 %v61
    %v151 = vunpack.c.l.b16 %v62
    %v152 = vunpack.c.h.b16 %v62
    %v153 = vunpack.c.l.b16 %v63
    %v154 = vunpack.c.h.b16 %v63
    %v155 = vunpack.c.l.b16 %v64
    %v156 = vunpack.c.h.b16 %v64
    %v157 = vunpack.c.l.b16 %v65
    %v158 = vunpack.c.h.b16 %v65
    %v159 = vunpack.c.l.b16 %v66
    %v160 = vunpack.c.h.b16 %v66
    %v161 = vpack.c.b16 %v153, %v149
    %v162 = vpack.c.b16 %v154, %v150
    %v163 = vpack.c.b16 %v155, %v151
    %v164 = vpack.c.b16 %v156, %v152
    %v165 = vpack.c.b16 %v157, %v157
    %v166 = vpack.c.b16 %v158, %v158
    %v167 = vpack.c.b16 %v159, %v159
    %v168 = vpack.c.b16 %v160, %v160
    %v241 = vunpack.c.l.b16 %v67
    %v242 = vunpack.c.h.b16 %v67
    %v243 = vunpack.c.l.b16 %v68
    %v244 = vunpack.c.h.b16 %v68
    %v245 = vunpack.c.l.b16 %v69
    %v246 = vunpack.c.h.b16 %v69
    %v247 = vunpack.c.l.b16 %v70
    %v248 = vunpack.c.h.b16 %v70
    %v249 = vunpack.c.l.b16 %v71
    %v250 = vunpack.c.h.b16 %v71
    %v251 = vunpack.c.l.b16 %v72
    %v252 = vunpack.c.h.b16 %v72
    %v253 = vunpack.c.l.b16 %v73
    %v254 = vunpack.c.h.b16 %v73
    %v255 = vunpack.c.l.b16 %v74
    %v256 = vunpack.c.h.b16 %v74
    %v257 = vunpack.c.l.b16 %v75
    %v258 = vunpack.c.h.b16 %v75
    %v259 = vunpack.c.l.b16 %v76
    %v260 = vunpack.c.h.b16 %v76
    %v261 = vunpack.c.l.b16 %v77
    %v262 = vunpack.c.h.b16 %v77
    %v263 = vunpack.c.l.b16 %v78
    %v264 = vunpack.c.h.b16 %v78
    %v265 = vunpack.c.l.b16 %v79
    %v266 = vunpack.c.h.b16 %v79
    %v267 = vunpack.c.l.b16 %v80
    %v268 = vunpack.c.h.b16 %v80
    %v269 = vunpack.c.l.b16 %v81
    %v270 = vunpack.c.h.b16 %v81
    %v271 = vunpack.c.l.b16 %v82
    %v272 = vunpack.c.h.b16 %v82
    %v273 = vunpack.c.l.b16 %v83
    %v274 = vunpack.c.h.b16 %v83
    %v275 = vunpack.c.l.b16 %v84
    %v276 = vunpack.c.h.b16 %v84
    %v277 = vunpack.c.l.b16 %v85
    %v278 = vunpack.c.h.b16 %v85
    %v279 = vunpack.c.l.b16 %v86
    %v280 = vunpack.c.h.b16 %v86
    %v281 = vunpack.c.l.b16 %v87
    %v282 = vunpack.c.h.b16 %v87
    %v283 = vunpack.c.l.b16 %v88
    %v284 = vunpack.c.h.b16 %v88
    %v285 = vunpack.c.l.b16 %v89
    %v286 = vunpack.c.h.b16 %v89
    %v287 = vunpack.c.l.b16 %v90
    %v288 = vunpack.c.h.b16 %v90
    %v289 = vunpack.c.l.b16 %v91
    %v290 = vunpack.c.h.b16 %v91
    %v291 = vunpack.c.l.b16 %v92
    %v292 = vunpack.c.h.b16 %v92
    %v293 = vunpack.c.l.b16 %v93
    %v294 = vunpack.c.h.b16 %v93
    %v295 = vunpack.c.l.b16 %v94
    %v296 = vunpack.c.h.b16 %v94
    %v297 = vunpack.c.l.b16 %v95
    %v298 = vunpack.c.h.b16 %v95
    %v299 = vunpack.c.l.b16 %v96
    %v300 = vunpack.c.h.b16 %v96
    %v301 = vunpack.c.l.b16 %v97
    %v302 = vunpack.c.h.b16 %v97
    %v303 = vunpack.c.l.b16 %v98
    %v304 = vunpack.c.h.b16 %v98
    %v305 = vunpack.c.l.b16 %v99
    %v306 = vunpack.c.h.b16 %v99
    %v307 = vunpack.c.l.b16 %v100
    %v308 = vunpack.c.h.b16 %v100
    %v309 = vunpack.c.l.b16 %v101
    %v310 = vunpack.c.h.b16 %v101
    %v311 = vunpack.c.l.b16 %v102
    %v312 = vunpack.c.h.b16 %v102
    %v313 = vunpack.c.l.b16 %v103
    %v314 = vunpack.c.h.b16 %v103
    %v315 = vunpack.c.l.b16 %v104
    %v316 = vunpack.c.h.b16 %v104
    %v317 = vunpack.c.l.b16 %v105
    %v318 = vunpack.c.h.b16 %v105
    %v319 = vunpack.c.l.b16 %v106
    %v320 = vunpack.c.h.b16 %v106
    %v321 = vunpack.c.l.b16 %v107
    %v322 = vunpack.c.h.b16 %v107
    %v323 = vunpack.c.l.b16 %v108
    %v324 = vunpack.c.h.b16 %v108
    %v325 = vunpack.c.l.b16 %v109
    %v326 = vunpack.c.h.b16 %v109
    %v327 = vunpack.c.l.b16 %v110
    %v328 = vunpack.c.h.b16 %v110
    %v329 = vunpack.c.l.b16 %v111
    %v330 = vunpack.c.h.b16 %v111
    %v331 = vunpack.c.l.b16 %v112
    %v332 = vunpack.c.h.b16 %v112
    %v333 = vunpack.c.l.b16 %v113
    %v334 = vunpack.c.h.b16 %v113
    %v335 = vunpack.c.l.b16 %v114
    %v336 = vunpack.c.h.b16 %v114
    %v337 = vunpack.c.l.b16 %v115
    %v338 = vunpack.c.h.b16 %v115
    %v339 = vunpack.c.l.b16 %v116
    %v340 = vunpack.c.h.b16 %v116
    %v341 = vunpack.c.l.b16 %v117
    %v342 = vunpack.c.h.b16 %v117
    %v343 = vunpack.c.l.b16 %v118
    %v344 = vunpack.c.h.b16 %v118
    %v345 = vunpack.c.l.b16 %v119
    %v346 = vunpack.c.h.b16 %v119
    %v347 = vunpack.c.l.b16 %v120
    %v348 = vunpack.c.h.b16 %v120
    %v349 = vunpack.c.l.b16 %v121
    %v350 = vunpack.c.h.b16 %v121
    %v351 = vunpack.c.l.b16 %v122
    %v352 = vunpack.c.h.b16 %v122
    %v353 = vunpack.c.l.b16 %v123
    %v354 = vunpack.c.h.b16 %v123
    %v355 = vunpack.c.l.b16 %v124
    %v356 = vunpack.c.h.b16 %v124
    %v357 = vunpack.c.l.b16 %v125
    %v358 = vunpack.c.h.b16 %v125
    %v359 = vunpack.c.l.b16 %v126
    %v360 = vunpack.c.h.b16 %v126
    %v361 = vunpack.c.l.b16 %v127
    %v362 = vunpack.c.h.b16 %v127
    %v363 = vunpack.c.l.b16 %v128
    %v364 = vunpack.c.h.b16 %v128
    %v365 = vunpack.c.l.b16 %v129
    %v366 = vunpack.c.h.b16 %v129
    %v367 = vunpack.c.l.b16 %v130
    %v368 = vunpack.c.h.b16 %v130
    %v369 = vpack.c.b16 %v243, %v241
    %v370 = vpack.c.b16 %v244, %v242
    %v371 = vpack.c.b16 %v247, %v245
    %v372 = vpack.c.b16 %v248, %v246
    %v373 = vpack.c.b16 %v251, %v249
    %v374 = vpack.c.b16 %v252, %v250
    %v375 = vpack.c.b16 %v255, %v253
    %v376 = vpack.c.b16 %v256, %v254
    %v377 = vpack.c.b16 %v259, %v257
    %v378 = vpack.c.b16 %v260, %v258
    %v379 = vpack.c.b16 %v263, %v261
    %v380 = vpack.c.b16 %v264, %v262
    %v381 = vpack.c.b16 %v267, %v265
    %v382 = vpack.c.b16 %v268, %v266
    %v383 = vpack.c.b16 %v271, %v269
    %v384 = vpack.c.b16 %v272, %v270
    %v385 = vpack.c.b16 %v275, %v273
    %v386 = vpack.c.b16 %v276, %v274
    %v387 = vpack.c.b16 %v279, %v277
    %v388 = vpack.c.b16 %v280, %v278
    %v389 = vpack.c.b16 %v283, %v281
    %v390 = vpack.c.b16 %v284, %v282
    %v391 = vpack.c.b16 %v287, %v285
    %v392 = vpack.c.b16 %v288, %v286
    %v393 = vpack.c.b16 %v291, %v289
    %v394 = vpack.c.b16 %v292, %v290
    %v395 = vpack.c.b16 %v295, %v293
    %v396 = vpack.c.b16 %v296, %v294
    %v397 = vpack.c.b16 %v299, %v297
    %v398 = vpack.c.b16 %v300, %v298
    %v399 = vpack.c.b16 %v303, %v301
    %v400 = vpack.c.b16 %v304, %v302
    %v401 = vpack.c.b16 %v307, %v305
    %v402 = vpack.c.b16 %v308, %v306
    %v403 = vpack.c.b16 %v311, %v309
    %v404 = vpack.c.b16 %v312, %v310
    %v405 = vpack.c.b16 %v315, %v313
    %v406 = vpack.c.b16 %v316, %v314
    %v407 = vpack.c.b16 %v319, %v317
    %v408 = vpack.c.b16 %v320, %v318
    %v409 = vpack.c.b16 %v323, %v321
    %v410 = vpack.c.b16 %v324, %v322
    %v411 = vpack.c.b16 %v327, %v325
    %v412 = vpack.c.b16 %v328, %v326
    %v413 = vpack.c.b16 %v331, %v329
    %v414 = vpack.c.b16 %v332, %v330
    %v415 = vpack.c.b16 %v335, %v333
    %v416 = vpack.c.b16 %v336, %v334
    %v417 = vpack.c.b16 %v339, %v337
    %v418 = vpack.c.b16 %v340, %v338
    %v419 = vpack.c.b16 %v343, %v341
    %v420 = vpack.c.b16 %v344, %v342
    %v421 = vpack.c.b16 %v347, %v345
    %v422 = vpack.c.b16 %v348, %v346
    %v423 = vpack.c.b16 %v351, %v349
    %v424 = vpack.c.b16 %v352, %v350
    %v425 = vpack.c.b16 %v355, %v353
    %v426 = vpack.c.b16 %v356, %v354
    %v427 = vpack.c.b16 %v359, %v357
    %v428 = vpack.c.b16 %v360, %v358
    %v429 = vpack.c.b16 %v363, %v361
    %v430 = vpack.c.b16 %v364, %v362
    %v431 = vpack.c.b16 %v367, %v365
    %v432 = vpack.c.b16 %v368, %v366
    %497 = vmatprep.subr.bf16.mxu0 %v370
    %498 = vmatpush1.bf16.msra.mxu0 %v369
    %499 = vmatprep.subr.bf16.mxu0 %v372
    %500 = vmatpush1.bf16.msra.mxu0 %v371
    %501 = vmatprep.subr.bf16.mxu0 %v374
    %502 = vmatpush1.bf16.msra.mxu0 %v373
    %503 = vmatprep.subr.bf16.mxu0 %v376
    %504 = vmatpush1.bf16.msra.mxu0 %v375
    %505 = vmatprep.subr.bf16.mxu0 %v378
    %506 = vmatpush1.bf16.msra.mxu0 %v377
    %507 = vmatprep.subr.bf16.mxu0 %v380
    %508 = vmatpush1.bf16.msra.mxu0 %v379
    %509 = vmatprep.subr.bf16.mxu0 %v382
    %510 = vmatpush1.bf16.msra.mxu0 %v381
    %511 = vmatprep.subr.bf16.mxu0 %v384
    %512 = vmatpush1.bf16.msra.mxu0 %v383
    %513 = vmatprep.subr.bf16.mxu0 %v386
    %514 = vmatpush1.bf16.msra.mxu0 %v385
    %515 = vmatprep.subr.bf16.mxu0 %v388
    %516 = vmatpush1.bf16.msra.mxu0 %v387
    %517 = vmatprep.subr.bf16.mxu0 %v390
    %518 = vmatpush1.bf16.msra.mxu0 %v389
    %519 = vmatprep.subr.bf16.mxu0 %v392
    %520 = vmatpush1.bf16.msra.mxu0 %v391
    %521 = vmatprep.subr.bf16.mxu0 %v394
    %522 = vmatpush1.bf16.msra.mxu0 %v393
    %523 = vmatprep.subr.bf16.mxu0 %v396
    %524 = vmatpush1.bf16.msra.mxu0 %v395
    %525 = vmatprep.subr.bf16.mxu0 %v398
    %526 = vmatpush1.bf16.msra.mxu0 %v397
    %527 = vmatprep.subr.bf16.mxu0 %v400
    %528 = vmatpush1.bf16.msra.mxu0 %v399
    %529 = vmatprep.mubr.bf16.mxu0 %v162
    %530 = vmatmul.mubr.bf16.gmra.mrb[0].mxu0 %v161
    %v531 = vpop.f32.mrb[0].mxu0
    %v532 = vadd.f32 %v136, %v531
    %v533 = vpop.f32.mrb[0].mxu0
    %v534 = vadd.f32 %v140, %v533
    %v535 = vpop.f32.mrb[0].mxu0
    %v536 = vadd.f32 %v136, %v535
    %v537 = vpop.f32.mrb[0].mxu0
    %v538 = vadd.f32 %v140, %v537
    %539 = vmatprep.mubr.bf16.mxu0 %v166
    %540 = vmatmul.mubr.bf16.gmra.mrb[0].mxu0 %v165
    %v541 = vpop.f32.mrb[0].mxu0
    %v542 = vadd.f32 %v136, %v541
    %v543 = vpop.f32.mrb[0].mxu0
    %v544 = vadd.f32 %v140, %v543
    %v545 = vpop.f32.mrb[0].mxu0
    %v546 = vpop.f32.mrb[0].mxu0
    %547 = vdwg.mxu0
    %548 = vmatprep.subr.bf16.mxu0 %v402
    %549 = vmatpush1.bf16.msra.mxu0 %v401
    %550 = vmatprep.subr.bf16.mxu0 %v404
    %551 = vmatpush1.bf16.msra.mxu0 %v403
    %552 = vmatprep.subr.bf16.mxu0 %v406
    %553 = vmatpush1.bf16.msra.mxu0 %v405
    %554 = vmatprep.subr.bf16.mxu0 %v408
    %555 = vmatpush1.bf16.msra.mxu0 %v407
    %556 = vmatprep.subr.bf16.mxu0 %v410
    %557 = vmatpush1.bf16.msra.mxu0 %v409
    %558 = vmatprep.subr.bf16.mxu0 %v412
    %559 = vmatpush1.bf16.msra.mxu0 %v411
    %560 = vmatprep.subr.bf16.mxu0 %v414
    %561 = vmatpush1.bf16.msra.mxu0 %v413
    %562 = vmatprep.subr.bf16.mxu0 %v416
    %563 = vmatpush1.bf16.msra.mxu0 %v415
    %564 = vmatprep.subr.bf16.mxu0 %v418
    %565 = vmatpush1.bf16.msra.mxu0 %v417
    %566 = vmatprep.subr.bf16.mxu0 %v420
    %567 = vmatpush1.bf16.msra.mxu0 %v419
    %568 = vmatprep.subr.bf16.mxu0 %v422
    %569 = vmatpush1.bf16.msra.mxu0 %v421
    %570 = vmatprep.subr.bf16.mxu0 %v424
    %571 = vmatpush1.bf16.msra.mxu0 %v423
    %572 = vmatprep.subr.bf16.mxu0 %v426
    %573 = vmatpush1.bf16.msra.mxu0 %v425
    %574 = vmatprep.subr.bf16.mxu0 %v428
    %575 = vmatpush1.bf16.msra.mxu0 %v427
    %576 = vmatprep.subr.bf16.mxu0 %v430
    %577 = vmatpush1.bf16.msra.mxu0 %v429
    %578 = vmatprep.subr.bf16.mxu0 %v432
    %579 = vmatpush1.bf16.msra.mxu0 %v431
    %580 = vmatprep.mubr.bf16.mxu0 %v164
    %581 = vmatmul.mubr.bf16.gmra.mrb[0].mxu0 %v163
    %v582 = vpop.f32.mrb[0].mxu0
    %v583 = vadd.f32 %v532, %v582
    %v584 = vpop.f32.mrb[0].mxu0
    %v585 = vadd.f32 %v534, %v584
    %v586 = vpop.f32.mrb[0].mxu0
    %v587 = vadd.f32 %v536, %v586
    %v588 = vpop.f32.mrb[0].mxu0
    %v589 = vadd.f32 %v538, %v588
    %590 = vmatprep.mubr.bf16.mxu0 %v168
    %591 = vmatmul.mubr.bf16.gmra.mrb[0].mxu0 %v167
    %v592 = vpop.f32.mrb[0].mxu0
    %v593 = vadd.f32 %v542, %v592
    %v594 = vpop.f32.mrb[0].mxu0
    %v595 = vadd.f32 %v544, %v594
    %v596 = vpop.f32.mrb[0].mxu0
    %v597 = vpop.f32.mrb[0].mxu0
    %598 = vdwg.mxu0
    %v599 = vmax.f32 %v583, 0.0
    %v600 = vmax.f32 %v585, 0.0
    %v601 = vmax.f32 %v587, 0.0
    %v602 = vmax.f32 %v589, 0.0
    %v603 = vmax.f32 %v593, 0.0
    %v604 = vmax.f32 %v595, 0.0
    %v605 = vpack.c.bf16 %v601, %v599
    %v606 = vpack.c.bf16 %v602, %v600
    %v607 = vpack.c.bf16 %v603, %v603
    %v608 = vpack.c.bf16 %v604, %v604
    %v609 = vld [vmem:[%s3] sm:$0xf]
    %v610 = vld [vmem:[%s3 + $0x4] sm:$0xf]
    %v611 = vld [vmem:[%s3 + $0x8] sm:$0xf]
    %v612 = vld [vmem:[%s3 + $0xc] sm:$0xf]
    %v613 = vld [vmem:[%s3 + $0x10] sm:$0xf]
    %v614 = vld [vmem:[%s3 + $0x14] sm:$0xf]
    %v615 = vld [vmem:[%s3 + $0x18] sm:$0xf]
    %v616 = vld [vmem:[%s3 + $0x1c] sm:$0xf]
    %v617 = vld [vmem:[%s3 + $0x20] sm:$0xf]
    %v618 = vld [vmem:[%s3 + $0x24] sm:$0xf]
    %v619 = vld [vmem:[%s3 + $0x28] sm:$0xf]
    %v620 = vld [vmem:[%s3 + $0x2c] sm:$0xf]
    %v621 = vld [vmem:[%s3 + $0x30] sm:$0xf]
    %v622 = vld [vmem:[%s3 + $0x34] sm:$0xf]
    %v623 = vld [vmem:[%s3 + $0x38] sm:$0xf]
    %v624 = vld [vmem:[%s3 + $0x3c] sm:$0xf]
    %v625 = vld [vmem:[%s3 + $0x40] sm:$0xf]
    %v626 = vld [vmem:[%s3 + $0x44] sm:$0xf]
    %v627 = vld [vmem:[%s3 + $0x48] sm:$0xf]
    %v628 = vld [vmem:[%s3 + $0x4c] sm:$0xf]
    %v629 = vld [vmem:[%s3 + $0x50] sm:$0xf]
    %v630 = vld [vmem:[%s3 + $0x54] sm:$0xf]
    %v631 = vld [vmem:[%s3 + $0x58] sm:$0xf]
    %v632 = vld [vmem:[%s3 + $0x5c] sm:$0xf]
    %v633 = vld [vmem:[%s3 + $0x60] sm:$0xf]
    %v634 = vld [vmem:[%s3 + $0x64] sm:$0xf]
    %v635 = vld [vmem:[%s3 + $0x68] sm:$0xf]
    %v636 = vld [vmem:[%s3 + $0x6c] sm:$0xf]
    %v637 = vld [vmem:[%s3 + $0x70] sm:$0xf]
    %v638 = vld [vmem:[%s3 + $0x74] sm:$0xf]
    %v639 = vld [vmem:[%s3 + $0x78] sm:$0xf]
    %v640 = vld [vmem:[%s3 + $0x7c] sm:$0xf]
    %v641 = vld [vmem:[%s4] sm:$0x1]
    %v643 = vlaneseq
    %v644 = vshrl.u32 %v643, 7
    %v645 = vsub.s32 0, %v644
    %v646 = vrot.slane %v641, %v645
    %v680 = vunpack.c.l.b16 %v609
    %v681 = vunpack.c.l.b16 %v610
    %v682 = vunpack.c.l.b16 %v611
    %v683 = vunpack.c.l.b16 %v612
    %v684 = vunpack.c.l.b16 %v613
    %v685 = vunpack.c.l.b16 %v614
    %v686 = vunpack.c.l.b16 %v615
    %v687 = vunpack.c.l.b16 %v616
    %v688 = vunpack.c.l.b16 %v617
    %v689 = vunpack.c.l.b16 %v618
    %v690 = vunpack.c.l.b16 %v619
    %v691 = vunpack.c.l.b16 %v620
    %v692 = vunpack.c.l.b16 %v621
    %v693 = vunpack.c.l.b16 %v622
    %v694 = vunpack.c.l.b16 %v623
    %v695 = vunpack.c.l.b16 %v624
    %v696 = vunpack.c.l.b16 %v625
    %v697 = vunpack.c.l.b16 %v626
    %v698 = vunpack.c.l.b16 %v627
    %v699 = vunpack.c.l.b16 %v628
    %v700 = vunpack.c.l.b16 %v629
    %v701 = vunpack.c.l.b16 %v630
    %v702 = vunpack.c.l.b16 %v631
    %v703 = vunpack.c.l.b16 %v632
    %v704 = vunpack.c.l.b16 %v633
    %v705 = vunpack.c.l.b16 %v634
    %v706 = vunpack.c.l.b16 %v635
    %v707 = vunpack.c.l.b16 %v636
    %v708 = vunpack.c.l.b16 %v637
    %v709 = vunpack.c.l.b16 %v638
    %v710 = vunpack.c.l.b16 %v639
    %v711 = vunpack.c.l.b16 %v640
    %v712 = vpack.c.b16 %v681, %v680
    %v713 = vpack.c.b16 %v683, %v682
    %v714 = vpack.c.b16 %v685, %v684
    %v715 = vpack.c.b16 %v687, %v686
    %v716 = vpack.c.b16 %v689, %v688
    %v717 = vpack.c.b16 %v691, %v690
    %v718 = vpack.c.b16 %v693, %v692
    %v719 = vpack.c.b16 %v695, %v694
    %v720 = vpack.c.b16 %v697, %v696
    %v721 = vpack.c.b16 %v699, %v698
    %v722 = vpack.c.b16 %v701, %v700
    %v723 = vpack.c.b16 %v703, %v702
    %v724 = vpack.c.b16 %v705, %v704
    %v725 = vpack.c.b16 %v707, %v706
    %v726 = vpack.c.b16 %v709, %v708
    %v727 = vpack.c.b16 %v711, %v710
    %744 = vmatprep.subr.bf16.mxu0 0
    %745 = vmatpush1.bf16.msra.mxu0 %v712
    %746 = vmatprep.subr.bf16.mxu0 0
    %747 = vmatpush1.bf16.msra.mxu0 %v713
    %748 = vmatprep.subr.bf16.mxu0 0
    %749 = vmatpush1.bf16.msra.mxu0 %v714
    %750 = vmatprep.subr.bf16.mxu0 0
    %751 = vmatpush1.bf16.msra.mxu0 %v715
    %752 = vmatprep.subr.bf16.mxu0 0
    %753 = vmatpush1.bf16.msra.mxu0 %v716
    %754 = vmatprep.subr.bf16.mxu0 0
    %755 = vmatpush1.bf16.msra.mxu0 %v717
    %756 = vmatprep.subr.bf16.mxu0 0
    %757 = vmatpush1.bf16.msra.mxu0 %v718
    %758 = vmatprep.subr.bf16.mxu0 0
    %759 = vmatpush1.bf16.msra.mxu0 %v719
    %760 = vmatprep.subr.bf16.mxu0 0
    %761 = vmatpush1.bf16.msra.mxu0 %v720
    %762 = vmatprep.subr.bf16.mxu0 0
    %763 = vmatpush1.bf16.msra.mxu0 %v721
    %764 = vmatprep.subr.bf16.mxu0 0
    %765 = vmatpush1.bf16.msra.mxu0 %v722
    %766 = vmatprep.subr.bf16.mxu0 0
    %767 = vmatpush1.bf16.msra.mxu0 %v723
    %768 = vmatprep.subr.bf16.mxu0 0
    %769 = vmatpush1.bf16.msra.mxu0 %v724
    %770 = vmatprep.subr.bf16.mxu0 0
    %771 = vmatpush1.bf16.msra.mxu0 %v725
    %772 = vmatprep.subr.bf16.mxu0 0
    %773 = vmatpush1.bf16.msra.mxu0 %v726
    %774 = vmatprep.subr.bf16.mxu0 0
    %775 = vmatpush1.bf16.msra.mxu0 %v727
    %776 = vmatprep.mubr.bf16.mxu0 %v606
    %777 = vmatmul.mubr.bf16.gmra.mrb[0].mxu0 %v605
    %v778 = vpop.f32.mrb[0].mxu0
    %v779 = vadd.f32 %v646, %v778
    %v780 = vpop.f32.mrb[0].mxu0
    %v781 = vpop.f32.mrb[0].mxu0
    %v782 = vadd.f32 %v646, %v781
    %v783 = vpop.f32.mrb[0].mxu0
    %784 = vmatprep.mubr.bf16.mxu0 %v608
    %785 = vmatmul.mubr.bf16.gmra.mrb[0].mxu0 %v607
    %v786 = vpop.f32.mrb[0].mxu0
    %v787 = vadd.f32 %v646, %v786
    %v788 = vpop.f32.mrb[0].mxu0
    %v789 = vpop.f32.mrb[0].mxu0
    %v790 = vpop.f32.mrb[0].mxu0
    %791 = vdwg.mxu0
    %v792 = vmax.f32 %v779, 0.0
    %v793 = vmax.f32 %v782, 0.0
    %v794 = vmax.f32 %v787, 0.0
    %v795 = vpack.c.bf16 %v793, %v792
    %v796 = vpack.c.bf16 %v794, %v794
    %v797 = vld [vmem:[%s5] sm:$0xf]
    %v798 = vld [vmem:[%s5 + $0x4] sm:$0xf]
    %v799 = vld [vmem:[%s5 + $0x8] sm:$0xf]
    %v800 = vld [vmem:[%s5 + $0xc] sm:$0xf]
    %v801 = vld [vmem:[%s5 + $0x10] sm:$0xf]
    %v802 = vld [vmem:[%s5 + $0x14] sm:$0xf]
    %v803 = vld [vmem:[%s5 + $0x18] sm:$0xf]
    %v804 = vld [vmem:[%s5 + $0x1c] sm:$0xf]
    %v805 = vld [vmem:[%s5 + $0x20] sm:$0xf]
    %v806 = vld [vmem:[%s5 + $0x24] sm:$0xf]
    %v807 = vld [vmem:[%s5 + $0x28] sm:$0xf]
    %v808 = vld [vmem:[%s5 + $0x2c] sm:$0xf]
    %v809 = vld [vmem:[%s5 + $0x30] sm:$0xf]
    %v810 = vld [vmem:[%s5 + $0x34] sm:$0xf]
    %v811 = vld [vmem:[%s5 + $0x38] sm:$0xf]
    %v812 = vld [vmem:[%s5 + $0x3c] sm:$0xf]
    %v813 = vld [vmem:[%s6] sm:$0x1]
    %v815 = vlaneseq
    %v816 = vshrl.u32 %v815, 7
    %v817 = vsub.s32 0, %v816
    %v818 = vrot.slane %v813, %v817
    %v836 = vunpack.c.l.b16 %v797
    %v837 = vunpack.c.l.b16 %v798
    %v838 = vunpack.c.l.b16 %v799
    %v839 = vunpack.c.l.b16 %v800
    %v840 = vunpack.c.l.b16 %v801
    %v841 = vunpack.c.l.b16 %v802
    %v842 = vunpack.c.l.b16 %v803
    %v843 = vunpack.c.l.b16 %v804
    %v844 = vunpack.c.l.b16 %v805
    %v845 = vunpack.c.l.b16 %v806
    %v846 = vunpack.c.l.b16 %v807
    %v847 = vunpack.c.l.b16 %v808
    %v848 = vunpack.c.l.b16 %v809
    %v849 = vunpack.c.l.b16 %v810
    %v850 = vunpack.c.l.b16 %v811
    %v851 = vunpack.c.l.b16 %v812
    %v852 = vpack.c.b16 %v837, %v836
    %v853 = vpack.c.b16 %v839, %v838
    %v854 = vpack.c.b16 %v841, %v840
    %v855 = vpack.c.b16 %v843, %v842
    %v856 = vpack.c.b16 %v845, %v844
    %v857 = vpack.c.b16 %v847, %v846
    %v858 = vpack.c.b16 %v849, %v848
    %v859 = vpack.c.b16 %v851, %v850
    %868 = vmatprep.subr.bf16.mxu0 0
    %869 = vmatpush1.bf16.msra.mxu0 %v852
    %870 = vmatprep.subr.bf16.mxu0 0
    %871 = vmatpush1.bf16.msra.mxu0 %v853
    %872 = vmatprep.subr.bf16.mxu0 0
    %873 = vmatpush1.bf16.msra.mxu0 %v854
    %874 = vmatprep.subr.bf16.mxu0 0
    %875 = vmatpush1.bf16.msra.mxu0 %v855
    %876 = vmatprep.subr.bf16.mxu0 0
    %877 = vmatpush1.bf16.msra.mxu0 %v856
    %878 = vmatprep.subr.bf16.mxu0 0
    %879 = vmatpush1.bf16.msra.mxu0 %v857
    %880 = vmatprep.subr.bf16.mxu0 0
    %881 = vmatpush1.bf16.msra.mxu0 %v858
    %882 = vmatprep.subr.bf16.mxu0 0
    %883 = vmatpush1.bf16.msra.mxu0 %v859
    %884 = vmatprep.subr.bf16.mxu0 0
    %885 = vmatpush1.bf16.msra.mxu0 0
    %886 = vmatprep.subr.bf16.mxu0 0
    %887 = vmatpush1.bf16.msra.mxu0 0
    %888 = vmatprep.subr.bf16.mxu0 0
    %889 = vmatpush1.bf16.msra.mxu0 0
    %890 = vmatprep.subr.bf16.mxu0 0
    %891 = vmatpush1.bf16.msra.mxu0 0
    %892 = vmatprep.subr.bf16.mxu0 0
    %893 = vmatpush1.bf16.msra.mxu0 0
    %894 = vmatprep.subr.bf16.mxu0 0
    %895 = vmatpush1.bf16.msra.mxu0 0
    %896 = vmatprep.subr.bf16.mxu0 0
    %897 = vmatpush1.bf16.msra.mxu0 0
    %898 = vmatprep.subr.bf16.mxu0 0
    %899 = vmatpush1.bf16.msra.mxu0 0
    %900 = vmatprep.mubr.bf16.mxu0 0
    %901 = vmatmul.mubr.bf16.gmra.mrb[0].mxu0 %v795
    %v902 = vpop.f32.mrb[0].mxu0
    %v903 = vadd.f32 %v818, %v902
    %v904 = vpop.f32.mrb[0].mxu0
    %v905 = vpop.f32.mrb[0].mxu0
    %v906 = vadd.f32 %v818, %v905
    %v907 = vpop.f32.mrb[0].mxu0
    %908 = vmatprep.mubr.bf16.mxu0 0
    %909 = vmatmul.mubr.bf16.gmra.mrb[0].mxu0 %v796
    %v910 = vpop.f32.mrb[0].mxu0
    %v911 = vadd.f32 %v818, %v910
    %v912 = vpop.f32.mrb[0].mxu0
    %v913 = vpop.f32.mrb[0].mxu0
    %v914 = vpop.f32.mrb[0].mxu0
    %915 = vdwg.mxu0
    %v916 = vmax.f32 %v903, 0.0
    %v917 = vmax.f32 %v906, 0.0
    %v918 = vmax.f32 %v911, 0.0
    %v919 = vpack.c.bf16 %v917, %v916
    %v920 = vpack.c.bf16 %v918, %v918
    %v921 = vld [vmem:[%s7] sm:$0xf]
    %v922 = vld [vmem:[%s7 + $0x4] sm:$0xf]
    %v923 = vld [vmem:[%s7 + $0x8] sm:$0xf]
    %v924 = vld [vmem:[%s7 + $0xc] sm:$0xf]
    %v925 = vld [vmem:[%s7 + $0x10] sm:$0xf]
    %v926 = vld [vmem:[%s7 + $0x14] sm:$0xf]
    %v927 = vld [vmem:[%s7 + $0x18] sm:$0xf]
    %v928 = vld [vmem:[%s7 + $0x1c] sm:$0xf]
    %v929 = vld [vmem:[%s8] sm:$0x1]
    %v931 = vlaneseq
    %v932 = vshrl.u32 %v931, 7
    %v933 = vsub.s32 0, %v932
    %v934 = vrot.slane %v929, %v933
    %v944 = vunpack.c.l.b16 %v921
    %v945 = vunpack.c.l.b16 %v922
    %v946 = vunpack.c.l.b16 %v923
    %v947 = vunpack.c.l.b16 %v924
    %v948 = vunpack.c.l.b16 %v925
    %v949 = vunpack.c.l.b16 %v926
    %v950 = vunpack.c.l.b16 %v927
    %v951 = vunpack.c.l.b16 %v928
    %v952 = vpack.c.b16 %v945, %v944
    %v953 = vpack.c.b16 %v947, %v946
    %v954 = vpack.c.b16 %v949, %v948
    %v955 = vpack.c.b16 %v951, %v950
    %vm960 = vcmask 523264
    %v962 = vsel %vm960, %v919, 0
    %v965 = vsel %vm960, %v920, 0
    %967 = vmatprep.subr.bf16.mxu0 0
    %968 = vmatpush1.bf16.msra.mxu0 %v952
    %969 = vmatprep.subr.bf16.mxu0 0
    %970 = vmatpush1.bf16.msra.mxu0 %v953
    %971 = vmatprep.subr.bf16.mxu0 0
    %972 = vmatpush1.bf16.msra.mxu0 %v954
    %973 = vmatprep.subr.bf16.mxu0 0
    %974 = vmatpush1.bf16.msra.mxu0 %v955
    %975 = vmatprep.subr.bf16.mxu0 0
    %976 = vmatpush1.bf16.msra.mxu0 0
    %977 = vmatprep.subr.bf16.mxu0 0
    %978 = vmatpush1.bf16.msra.mxu0 0
    %979 = vmatprep.subr.bf16.mxu0 0
    %980 = vmatpush1.bf16.msra.mxu0 0
    %981 = vmatprep.subr.bf16.mxu0 0
    %982 = vmatpush1.bf16.msra.mxu0 0
    %983 = vmatprep.subr.bf16.mxu0 0
    %984 = vmatpush1.bf16.msra.mxu0 0
    %985 = vmatprep.subr.bf16.mxu0 0
    %986 = vmatpush1.bf16.msra.mxu0 0
    %987 = vmatprep.subr.bf16.mxu0 0
    %988 = vmatpush1.bf16.msra.mxu0 0
    %989 = vmatprep.subr.bf16.mxu0 0
    %990 = vmatpush1.bf16.msra.mxu0 0
    %991 = vmatprep.subr.bf16.mxu0 0
    %992 = vmatpush1.bf16.msra.mxu0 0
    %993 = vmatprep.subr.bf16.mxu0 0
    %994 = vmatpush1.bf16.msra.mxu0 0
    %995 = vmatprep.subr.bf16.mxu0 0
    %996 = vmatpush1.bf16.msra.mxu0 0
    %997 = vmatprep.subr.bf16.mxu0 0
    %998 = vmatpush1.bf16.msra.mxu0 0
    %999 = vmatprep.mubr.bf16.mxu0 0
    %1000 = vmatmul.mubr.bf16.gmra.mrb[0].mxu0 %v962
    %v1001 = vpop.f32.mrb[0].mxu0
    %v1002 = vadd.f32 %v934, %v1001
    %v1003 = vpop.f32.mrb[0].mxu0
    %v1004 = vpop.f32.mrb[0].mxu0
    %v1005 = vadd.f32 %v934, %v1004
    %v1006 = vpop.f32.mrb[0].mxu0
    %1007 = vmatprep.mubr.bf16.mxu0 0
    %1008 = vmatmul.mubr.bf16.gmra.mrb[0].mxu0 %v965
    %v1009 = vpop.f32.mrb[0].mxu0
    %v1010 = vadd.f32 %v934, %v1009
    %v1011 = vpop.f32.mrb[0].mxu0
    %v1012 = vpop.f32.mrb[0].mxu0
    %v1013 = vpop.f32.mrb[0].mxu0
    %1014 = vdwg.mxu0
    %v1015 = vxor.u32 %v1002, 2147483648
    %v1016 = vxor.u32 %v1005, 2147483648
    %v1017 = vxor.u32 %v1010, 2147483648
    %v1018 = vmul.f32 %v1015, 1.442695
    %v1019 = vpow.pop %v1018
    %v1020 = vmul.f32 %v1016, 1.442695
    %v1021 = vpow.pop %v1020
    %v1022 = vmul.f32 %v1017, 1.442695
    %v1023 = vpow.pop %v1022
    %v1024 = vadd.f32 %v1019, 1.0
    %v1025 = vadd.f32 %v1021, 1.0
    %v1026 = vadd.f32 %v1023, 1.0
    %v1027 = vrcp.pop %v1024
    %v1028 = vmul.f32 1.0, %v1027
    %v1029 = vrcp.pop %v1025
    %v1030 = vmul.f32 1.0, %v1029
    %v1031 = vrcp.pop %v1026
    %v1032 = vmul.f32 1.0, %v1031
    %vm1033 = vcmask 64512
    %1034 = vst.msk [vmem:[%s9] sm:$0xff] %vm1033, %v1028
    %1035 = vst.msk [vmem:[%s9 + $0x8] sm:$0xff] %vm1033, %v1030
    %1036 = vst.msk [vmem:[%s9 + $0x10] sm:$0xff] %vm1033, %v1032
    // Predicated region
    $region46: #{tpu_custom_call.1} parent=1 // pred_check
      _
    $region47: #{tpu_custom_call.1} parent=1 // pred_check_branch
      %1038 = sbr.rel (0) target = $region49
    $region48: #{tpu_custom_call.1} parent=1 // pred_region
      _
    $region49: #{tpu_custom_call.1} parent=1 // pred_fallthru
      _
    // Predicated region
    $region50: #{tpu_custom_call.1} parent=1 // pred_check
      _
    $region51: #{tpu_custom_call.1} parent=1 // pred_check_branch
      %1040 = sbr.rel (0) target = $region53
    $region52: #{tpu_custom_call.1} parent=1 // pred_region
      _
    $region53: #{tpu_custom_call.1} parent=1 // pred_fallthru
      _
    %1041 = vsyncpa [#allocation3], 1
    %1042 = vsyncpa [#allocation5], 1

</llo_original>
